<compile_context>
chip_gen: v7x
topology: tpu7x:2x2x1
jax: 0.10.0
libtpu: 0.0.40
codegen_flags: <defaults>
</compile_context>

<pallas_src>
import jax
import jax.numpy as jnp
from jax.experimental import pallas as pl
from jax.experimental.pallas import tpu as pltpu

HIDDEN_SIZE = 30
INPUT_SIZE = 4
OUTPUT_SIZE = 3

TILE_B = 1024   # batch columns (lanes) per grid step; multiple of 256


def modelo_iris_kernel(x_ref, w1_ref, b1_ref, w2_ref, b2_ref,
                       w3_ref, b3_ref, wo_ref, bo_ref, o_ref):
    dt = w1_ref.dtype  # MXU operand dtype (f32 or bf16); accumulation is f32.

    x = x_ref[...]                                           # (I, TB)
    z1 = jnp.dot(w1_ref[...], x,
                 preferred_element_type=jnp.float32) + b1_ref[...]   # (H, TB)
    h1 = jax.nn.sigmoid(z1)

    z2 = jnp.dot(w2_ref[...], h1.astype(dt),
                 preferred_element_type=jnp.float32) + b2_ref[...]   # (H, TB)
    h2 = jax.nn.sigmoid(z2)

    z3 = jnp.dot(w3_ref[...], h2.astype(dt),
                 preferred_element_type=jnp.float32) + b3_ref[...]   # (H, TB)
    h3 = jax.nn.sigmoid(z3)

    logits = jnp.dot(wo_ref[...], h3.astype(dt),
                     preferred_element_type=jnp.float32) + bo_ref[...]  # (O, TB)

    # log_softmax over the class (sublane) axis — only 3 rows, XLU-cheap.
    m = jnp.max(logits, axis=0, keepdims=True)               # (1, TB)
    shifted = logits - m
    lse = jnp.log(jnp.sum(jnp.exp(shifted), axis=0, keepdims=True))
    o_ref[...] = (shifted - lse).astype(o_ref.dtype)         # (O, TB) store


def modelo_iris_forward(x, params, *, tile_b=TILE_B, compute_dtype=jnp.float32,
                        out_dtype=jnp.float32, core_parallel=False):
    """x: (B, INPUT_SIZE). params: (out, in) weights / (out, 1) biases.

    compute_dtype=jnp.bfloat16 halves MXU passes + X DMA traffic on every TPU
    generation (v5e/v6e/v7x MXUs are bf16-native); accumulation stays f32.
    out_dtype=jnp.bfloat16 halves the output writeback if downstream allows.
    core_parallel=True shards the batch grid across v7x's 2 TensorCores.
    """
    b = x.shape[0]
    # Tile sizing: a single full-extent block for small batches (block dims
    # equal the array dims -> always legal), otherwise a 128-multiple tile
    # with a ragged (masked) last block — no wrapper-side padding copy.
    if b <= tile_b:
        tile_b = b
        num_tiles = 1
    else:
        assert tile_b % 128 == 0, "tile_b must be a multiple of 128"
        num_tiles = pl.cdiv(b, tile_b)

    x_t = x.astype(compute_dtype).T                          # (I, B), batch on lanes

    w1 = params["w1"].astype(compute_dtype)
    w2 = params["w2"].astype(compute_dtype)
    w3 = params["w3"].astype(compute_dtype)
    wo = params["wo"].astype(compute_dtype)
    # Biases stay f32 (added after the f32 accumulation).
    b1 = params["b1"].astype(jnp.float32)
    b2 = params["b2"].astype(jnp.float32)
    b3 = params["b3"].astype(jnp.float32)
    bo = params["bo"].astype(jnp.float32)

    def resident(arr):
        # Constant index_map -> same block every grid step -> DMA'd once and
        # kept resident in VMEM for the whole batch loop.
        # TODO(synk): pipeline_mode=pl.Buffered(1) would drop the pointless
        # second buffer for these constant blocks (few KiB saved); left off
        # for maximal compatibility.
        return pl.BlockSpec(arr.shape, lambda i: (0, 0))

    in_specs = [
        pl.BlockSpec((INPUT_SIZE, tile_b), lambda i: (0, i)),  # X tiled on batch
        resident(w1), resident(b1),
        resident(w2), resident(b2),
        resident(w3), resident(b3),
        resident(wo), resident(bo),
    ]
    out_spec = pl.BlockSpec((OUTPUT_SIZE, tile_b), lambda i: (0, i))

    # Advisory cost estimate (narrow output reflected in bytes_accessed).
    itemsize = jnp.dtype(compute_dtype).itemsize
    flops = 2 * b * (INPUT_SIZE * HIDDEN_SIZE
                     + 2 * HIDDEN_SIZE * HIDDEN_SIZE
                     + HIDDEN_SIZE * OUTPUT_SIZE)
    transcendentals = b * (3 * HIDDEN_SIZE + OUTPUT_SIZE)    # sigmoids + exps
    weight_bytes = (w1.size + w2.size + w3.size + wo.size) * itemsize \
        + (b1.size + b2.size + b3.size + bo.size) * 4
    bytes_accessed = (b * INPUT_SIZE * itemsize
                      + b * OUTPUT_SIZE * jnp.dtype(out_dtype).itemsize
                      + weight_bytes)

    dim_sem = (pltpu.CORE_PARALLEL,) if core_parallel else ("parallel",)

    out_t = pl.pallas_call(
        modelo_iris_kernel,
        out_shape=jax.ShapeDtypeStruct((OUTPUT_SIZE, b), out_dtype),
        grid=(num_tiles,),
        in_specs=in_specs,
        out_specs=out_spec,
        compiler_params=pltpu.CompilerParams(dimension_semantics=dim_sem),
        cost_estimate=pl.CostEstimate(
            flops=flops, transcendentals=transcendentals,
            bytes_accessed=bytes_accessed),
    )(x_t, w1, b1, w2, b2, w3, b3, wo, bo)

    return out_t.T   # (B, OUTPUT_SIZE) log-probs, tiny layout-plumbing transpose


def init_params(key):
    """Deterministic synthetic init. Weights stored (out, in) like nn.Linear."""
    ks = jax.random.split(key, 8)

    def lin(kw, kb, fan_in, fan_out):
        bound = 1.0 / jnp.sqrt(jnp.float32(fan_in))
        w = jax.random.uniform(kw, (fan_out, fan_in), jnp.float32, -bound, bound)
        b = jax.random.uniform(kb, (fan_out, 1), jnp.float32, -bound, bound)
        return w, b

    w1, b1 = lin(ks[0], ks[1], INPUT_SIZE, HIDDEN_SIZE)
    w2, b2 = lin(ks[2], ks[3], HIDDEN_SIZE, HIDDEN_SIZE)
    w3, b3 = lin(ks[4], ks[5], HIDDEN_SIZE, HIDDEN_SIZE)
    wo, bo = lin(ks[6], ks[7], HIDDEN_SIZE, OUTPUT_SIZE)
    return {"w1": w1, "b1": b1, "w2": w2, "b2": b2,
            "w3": w3, "b3": b3, "wo": wo, "bo": bo}


def reference_forward(x, params):
    h = jax.nn.sigmoid(x @ params["w1"].T + params["b1"][:, 0])
    h = jax.nn.sigmoid(h @ params["w2"].T + params["b2"][:, 0])
    h = jax.nn.sigmoid(h @ params["w3"].T + params["b3"][:, 0])
    logits = h @ params["wo"].T + params["bo"][:, 0]
    return jax.nn.log_softmax(logits, axis=-1)


if __name__ == "__main__":
    key = jax.random.PRNGKey(0)
    k_params, k_x1, k_x2 = jax.random.split(key, 3)
    params = init_params(k_params)

    # Small-batch smoke test (single full-extent block path).
    batch = 8
    x = jax.random.normal(k_x1, (batch, INPUT_SIZE), dtype=jnp.float32)
    out = jax.block_until_ready(modelo_iris_forward(x, params))
    ref = reference_forward(x, params)
    assert out.shape == (batch, OUTPUT_SIZE)
    assert jnp.allclose(out, ref, atol=1e-5, rtol=1e-5)
    assert jnp.allclose(jnp.sum(jnp.exp(out), axis=-1), 1.0, atol=1e-5)

    # Multi-tile batch with a ragged last block (520 = 4*128 + 8).
    batch2 = 520
    x2 = jax.random.normal(k_x2, (batch2, INPUT_SIZE), dtype=jnp.float32)
    out2 = jax.block_until_ready(modelo_iris_forward(x2, params, tile_b=128))
    ref2 = reference_forward(x2, params)
    assert out2.shape == (batch2, OUTPUT_SIZE)
    assert jnp.allclose(out2, ref2, atol=1e-5, rtol=1e-5)

    # bf16 operand path (MXU-native on v5e/v6e/v7x); f32 accumulation, loose tol.
    out_bf16 = jax.block_until_ready(
        modelo_iris_forward(x2, params, compute_dtype=jnp.bfloat16))
    assert out_bf16.shape == (batch2, OUTPUT_SIZE)
    assert jnp.allclose(out_bf16, ref2, atol=5e-2)

    print("KERNEL_OK")
</pallas_src>

<mosaic_0001>
module attributes {stable_mosaic.version = 11 : i64} {
  func.func @modelo_iris_kernel(%arg0: i32, %arg1: memref<4x8xf32, #tpu.memory_space<vmem>>, %arg2: memref<30x4xf32, #tpu.memory_space<vmem>>, %arg3: memref<30x1xf32, #tpu.memory_space<vmem>>, %arg4: memref<30x30xf32, #tpu.memory_space<vmem>>, %arg5: memref<30x1xf32, #tpu.memory_space<vmem>>, %arg6: memref<30x30xf32, #tpu.memory_space<vmem>>, %arg7: memref<30x1xf32, #tpu.memory_space<vmem>>, %arg8: memref<3x30xf32, #tpu.memory_space<vmem>>, %arg9: memref<3x1xf32, #tpu.memory_space<vmem>>, %arg10: memref<3x8xf32, #tpu.memory_space<vmem>>) attributes {dimension_semantics = [#tpu.dimension_semantics<parallel>], iteration_bounds = array<i64: 1>, scalar_prefetch = 0 : i64, scratch_operands = 0 : i64, tpu.core_type = #tpu.core_type<tc>, window_params = [{transform_indices = @transform_0, window_bounds = array<i64: 4, 8>}, {pipeline_mode = #tpu.pipeline_mode<synchronous>, transform_indices = @transform_1, window_bounds = array<i64: 30, 4>}, {pipeline_mode = #tpu.pipeline_mode<synchronous>, transform_indices = @transform_2, window_bounds = array<i64: 30, 1>}, {pipeline_mode = #tpu.pipeline_mode<synchronous>, transform_indices = @transform_3, window_bounds = array<i64: 30, 30>}, {pipeline_mode = #tpu.pipeline_mode<synchronous>, transform_indices = @transform_4, window_bounds = array<i64: 30, 1>}, {pipeline_mode = #tpu.pipeline_mode<synchronous>, transform_indices = @transform_5, window_bounds = array<i64: 30, 30>}, {pipeline_mode = #tpu.pipeline_mode<synchronous>, transform_indices = @transform_6, window_bounds = array<i64: 30, 1>}, {pipeline_mode = #tpu.pipeline_mode<synchronous>, transform_indices = @transform_7, window_bounds = array<i64: 3, 30>}, {pipeline_mode = #tpu.pipeline_mode<synchronous>, transform_indices = @transform_8, window_bounds = array<i64: 3, 1>}, {transform_indices = @transform_9, window_bounds = array<i64: 3, 8>}]} {
    %c0 = arith.constant 0 : index
    %c0_0 = arith.constant 0 : index
    %0 = vector.load %arg1[%c0, %c0_0] : memref<4x8xf32, #tpu.memory_space<vmem>>, vector<4x8xf32>
    %c0_1 = arith.constant 0 : index
    %c0_2 = arith.constant 0 : index
    %1 = vector.load %arg2[%c0_1, %c0_2] : memref<30x4xf32, #tpu.memory_space<vmem>>, vector<30x4xf32>
    %cst = arith.constant dense<0.000000e+00> : vector<30x8xf32>
    %2 = tpu.matmul %1, %0, %cst {dimension_numbers = #tpu.dot_dimension_numbers<[1], [0], [0], [1], [0, 0, 1, 1], [], []>} : vector<30x4xf32>, vector<4x8xf32>, vector<30x8xf32> -> vector<30x8xf32>
    %c0_3 = arith.constant 0 : index
    %c0_4 = arith.constant 0 : index
    %3 = vector.load %arg3[%c0_3, %c0_4] : memref<30x1xf32, #tpu.memory_space<vmem>>, vector<30x1xf32>
    %4 = vector.broadcast %3 : vector<30x1xf32> to vector<30x8xf32>
    %5 = arith.addf %2, %4 : vector<30x8xf32>
    %6 = arith.negf %5 : vector<30x8xf32>
    %7 = math.exp %6 : vector<30x8xf32>
    %cst_5 = arith.constant 1.000000e+00 : f32
    %8 = vector.broadcast %cst_5 : f32 to vector<30x8xf32>
    %9 = arith.addf %8, %7 : vector<30x8xf32>
    %10 = arith.divf %8, %9 : vector<30x8xf32>
    %c0_6 = arith.constant 0 : index
    %c0_7 = arith.constant 0 : index
    %11 = vector.load %arg4[%c0_6, %c0_7] : memref<30x30xf32, #tpu.memory_space<vmem>>, vector<30x30xf32>
    %cst_8 = arith.constant dense<0.000000e+00> : vector<30x8xf32>
    %12 = tpu.matmul %11, %10, %cst_8 {dimension_numbers = #tpu.dot_dimension_numbers<[1], [0], [0], [1], [0, 0, 1, 1], [], []>} : vector<30x30xf32>, vector<30x8xf32>, vector<30x8xf32> -> vector<30x8xf32>
    %c0_9 = arith.constant 0 : index
    %c0_10 = arith.constant 0 : index
    %13 = vector.load %arg5[%c0_9, %c0_10] : memref<30x1xf32, #tpu.memory_space<vmem>>, vector<30x1xf32>
    %14 = vector.broadcast %13 : vector<30x1xf32> to vector<30x8xf32>
    %15 = arith.addf %12, %14 : vector<30x8xf32>
    %16 = arith.negf %15 : vector<30x8xf32>
    %17 = math.exp %16 : vector<30x8xf32>
    %cst_11 = arith.constant 1.000000e+00 : f32
    %18 = vector.broadcast %cst_11 : f32 to vector<30x8xf32>
    %19 = arith.addf %18, %17 : vector<30x8xf32>
    %20 = arith.divf %18, %19 : vector<30x8xf32>
    %c0_12 = arith.constant 0 : index
    %c0_13 = arith.constant 0 : index
    %21 = vector.load %arg6[%c0_12, %c0_13] : memref<30x30xf32, #tpu.memory_space<vmem>>, vector<30x30xf32>
    %cst_14 = arith.constant dense<0.000000e+00> : vector<30x8xf32>
    %22 = tpu.matmul %21, %20, %cst_14 {dimension_numbers = #tpu.dot_dimension_numbers<[1], [0], [0], [1], [0, 0, 1, 1], [], []>} : vector<30x30xf32>, vector<30x8xf32>, vector<30x8xf32> -> vector<30x8xf32>
    %c0_15 = arith.constant 0 : index
    %c0_16 = arith.constant 0 : index
    %23 = vector.load %arg7[%c0_15, %c0_16] : memref<30x1xf32, #tpu.memory_space<vmem>>, vector<30x1xf32>
    %24 = vector.broadcast %23 : vector<30x1xf32> to vector<30x8xf32>
    %25 = arith.addf %22, %24 : vector<30x8xf32>
    %26 = arith.negf %25 : vector<30x8xf32>
    %27 = math.exp %26 : vector<30x8xf32>
    %cst_17 = arith.constant 1.000000e+00 : f32
    %28 = vector.broadcast %cst_17 : f32 to vector<30x8xf32>
    %29 = arith.addf %28, %27 : vector<30x8xf32>
    %30 = arith.divf %28, %29 : vector<30x8xf32>
    %c0_18 = arith.constant 0 : index
    %c0_19 = arith.constant 0 : index
    %31 = vector.load %arg8[%c0_18, %c0_19] : memref<3x30xf32, #tpu.memory_space<vmem>>, vector<3x30xf32>
    %cst_20 = arith.constant dense<0.000000e+00> : vector<3x8xf32>
    %32 = tpu.matmul %31, %30, %cst_20 {dimension_numbers = #tpu.dot_dimension_numbers<[1], [0], [0], [1], [0, 0, 1, 1], [], []>} : vector<3x30xf32>, vector<30x8xf32>, vector<3x8xf32> -> vector<3x8xf32>
    %c0_21 = arith.constant 0 : index
    %c0_22 = arith.constant 0 : index
    %33 = vector.load %arg9[%c0_21, %c0_22] : memref<3x1xf32, #tpu.memory_space<vmem>>, vector<3x1xf32>
    %34 = vector.broadcast %33 : vector<3x1xf32> to vector<3x8xf32>
    %35 = arith.addf %32, %34 : vector<3x8xf32>
    %cst_23 = arith.constant dense<0xFF800000> : vector<8xf32>
    %36 = vector.multi_reduction <maximumf>, %35, %cst_23 [0] : vector<3x8xf32> to vector<8xf32>
    %37 = vector.shape_cast %36 : vector<8xf32> to vector<1x8xf32>
    %38 = vector.broadcast %37 : vector<1x8xf32> to vector<3x8xf32>
    %39 = arith.subf %35, %38 : vector<3x8xf32>
    %40 = math.exp %39 : vector<3x8xf32>
    %cst_24 = arith.constant dense<0.000000e+00> : vector<8xf32>
    %41 = vector.multi_reduction <add>, %40, %cst_24 [0] : vector<3x8xf32> to vector<8xf32>
    %42 = vector.shape_cast %41 : vector<8xf32> to vector<1x8xf32>
    %43 = math.log %42 : vector<1x8xf32>
    %44 = vector.broadcast %43 : vector<1x8xf32> to vector<3x8xf32>
    %45 = arith.subf %39, %44 : vector<3x8xf32>
    %c0_25 = arith.constant 0 : index
    %c0_26 = arith.constant 0 : index
    %46 = vector.load %arg10[%c0_25, %c0_26] : memref<3x8xf32, #tpu.memory_space<vmem>>, vector<3x8xf32>
    tpu.vector_store %arg10[%c0_25, %c0_26], %45 {strides = array<i32>} : memref<3x8xf32, #tpu.memory_space<vmem>>, vector<3x8xf32>,
    return
  }
  func.func @transform_0(%arg0: i32) -> (i32, i32) {
    %c0_i32 = arith.constant 0 : i32
    %c0_i32_0 = arith.constant 0 : i32
    return %c0_i32, %arg0 : i32, i32
  }
  func.func @transform_1(%arg0: i32) -> (i32, i32) {
    %c0_i32 = arith.constant 0 : i32
    %c0_i32_0 = arith.constant 0 : i32
    %c0_i32_1 = arith.constant 0 : i32
    return %c0_i32, %c0_i32_0 : i32, i32
  }
  func.func @transform_2(%arg0: i32) -> (i32, i32) {
    %c0_i32 = arith.constant 0 : i32
    %c0_i32_0 = arith.constant 0 : i32
    %c0_i32_1 = arith.constant 0 : i32
    return %c0_i32, %c0_i32_0 : i32, i32
  }
  func.func @transform_3(%arg0: i32) -> (i32, i32) {
    %c0_i32 = arith.constant 0 : i32
    %c0_i32_0 = arith.constant 0 : i32
    %c0_i32_1 = arith.constant 0 : i32
    return %c0_i32, %c0_i32_0 : i32, i32
  }
  func.func @transform_4(%arg0: i32) -> (i32, i32) {
    %c0_i32 = arith.constant 0 : i32
    %c0_i32_0 = arith.constant 0 : i32
    %c0_i32_1 = arith.constant 0 : i32
    return %c0_i32, %c0_i32_0 : i32, i32
  }
  func.func @transform_5(%arg0: i32) -> (i32, i32) {
    %c0_i32 = arith.constant 0 : i32
    %c0_i32_0 = arith.constant 0 : i32
    %c0_i32_1 = arith.constant 0 : i32
    return %c0_i32, %c0_i32_0 : i32, i32
  }
  func.func @transform_6(%arg0: i32) -> (i32, i32) {
    %c0_i32 = arith.constant 0 : i32
    %c0_i32_0 = arith.constant 0 : i32
    %c0_i32_1 = arith.constant 0 : i32
    return %c0_i32, %c0_i32_0 : i32, i32
  }
  func.func @transform_7(%arg0: i32) -> (i32, i32) {
    %c0_i32 = arith.constant 0 : i32
    %c0_i32_0 = arith.constant 0 : i32
    %c0_i32_1 = arith.constant 0 : i32
    return %c0_i32, %c0_i32_0 : i32, i32
  }
  func.func @transform_8(%arg0: i32) -> (i32, i32) {
    %c0_i32 = arith.constant 0 : i32
    %c0_i32_0 = arith.constant 0 : i32
    %c0_i32_1 = arith.constant 0 : i32
    return %c0_i32, %c0_i32_0 : i32, i32
  }
  func.func @transform_9(%arg0: i32) -> (i32, i32) {
    %c0_i32 = arith.constant 0 : i32
    %c0_i32_0 = arith.constant 0 : i32
    return %c0_i32, %arg0 : i32, i32
  }
}

</mosaic_0001>

<llo_original>
// kernel: tpu_custom_call.1
$region0: #{tpu_custom_call.1}
  #allocation0 [shape = 'u32[]', space=smem, size = 0x4, offset = 0x4, fixed_abs, tag = 'smem constant byte address 0x4 - core index']
  #allocation1 [shape = 'u32[144,128]{1,0:T(1,128)}', space=vmem, size = 0x12000, scoped, tag = 'internal scratch']
  %s0 = inlined_call_operand.vmem [shape: f32[4,8], index: 0, kind: input, shape index: {}]
  %s1 = inlined_call_operand.vmem [shape: f32[30,4], index: 1, kind: input, shape index: {}]
  %s2 = inlined_call_operand.vmem [shape: f32[30,1], index: 2, kind: input, shape index: {}]
  %s3 = inlined_call_operand.vmem [shape: f32[30,30], index: 3, kind: input, shape index: {}]
  %s4 = inlined_call_operand.vmem [shape: f32[30,1], index: 4, kind: input, shape index: {}]
  %s5 = inlined_call_operand.vmem [shape: f32[30,30], index: 5, kind: input, shape index: {}]
  %s6 = inlined_call_operand.vmem [shape: f32[30,1], index: 6, kind: input, shape index: {}]
  %s7 = inlined_call_operand.vmem [shape: f32[3,30], index: 7, kind: input, shape index: {}]
  %s8 = inlined_call_operand.vmem [shape: f32[3,1], index: 8, kind: input, shape index: {}]
  %s9 = inlined_call_operand.hbm [shape: f32[3,8], index: 9, kind: output, shape index: {}]
  %s10 = sld [smem:[#allocation0]]
  $region46: #{tpu_custom_call.1} parent=0
    _
  %s12 = ssub.s32 1, %s10
  %s13 = scalar_select 0, %s12, %s10
  $region1: #{tpu_custom_call.1} parent=0
    #allocation2 [shape = 'u8[2048]{0}', space=vmem, size = 0x800, scoped, tag = 'output window, operand 0, single buffered']
    #allocation3 [shape = 's32[1]{0}', space=sflag, size = 0x4, scoped, tag = 'scoped memory for tpu_custom_call.1']
    %14 = vsyncpa [#allocation3], 0
    // Predicated region
    $region2: #{tpu_custom_call.1} parent=1 // pred_check
      _
    $region3: #{tpu_custom_call.1} parent=1 // pred_check_branch
      %16 = sbr.rel (0) target = $region5
    $region4: #{tpu_custom_call.1} parent=1 // pred_region
      _
    $region5: #{tpu_custom_call.1} parent=1 // pred_fallthru
      _
    // Predicated region
    $region6: #{tpu_custom_call.1} parent=1 // pred_check
      _
    $region7: #{tpu_custom_call.1} parent=1 // pred_check_branch
      %18 = sbr.rel (0) target = $region9
    $region8: #{tpu_custom_call.1} parent=1 // pred_region
      _
    $region9: #{tpu_custom_call.1} parent=1 // pred_fallthru
      _
    // Predicated region
    $region10: #{tpu_custom_call.1} parent=1 // pred_check
      _
    $region11: #{tpu_custom_call.1} parent=1 // pred_check_branch
      %20 = sbr.rel (0) target = $region13
    $region12: #{tpu_custom_call.1} parent=1 // pred_region
      _
    $region13: #{tpu_custom_call.1} parent=1 // pred_fallthru
      _
    // Predicated region
    $region14: #{tpu_custom_call.1} parent=1 // pred_check
      _
    $region15: #{tpu_custom_call.1} parent=1 // pred_check_branch
      %22 = sbr.rel (0) target = $region17
    $region16: #{tpu_custom_call.1} parent=1 // pred_region
      _
    $region17: #{tpu_custom_call.1} parent=1 // pred_fallthru
      _
    // Predicated region
    $region18: #{tpu_custom_call.1} parent=1 // pred_check
      _
    $region19: #{tpu_custom_call.1} parent=1 // pred_check_branch
      %24 = sbr.rel (0) target = $region21
    $region20: #{tpu_custom_call.1} parent=1 // pred_region
      _
    $region21: #{tpu_custom_call.1} parent=1 // pred_fallthru
      _
    // Predicated region
    $region22: #{tpu_custom_call.1} parent=1 // pred_check
      _
    $region23: #{tpu_custom_call.1} parent=1 // pred_check_branch
      %26 = sbr.rel (0) target = $region25
    $region24: #{tpu_custom_call.1} parent=1 // pred_region
      _
    $region25: #{tpu_custom_call.1} parent=1 // pred_fallthru
      _
    // Predicated region
    $region26: #{tpu_custom_call.1} parent=1 // pred_check
      _
    $region27: #{tpu_custom_call.1} parent=1 // pred_check_branch
      %28 = sbr.rel (0) target = $region29
    $region28: #{tpu_custom_call.1} parent=1 // pred_region
      _
    $region29: #{tpu_custom_call.1} parent=1 // pred_fallthru
      _
    // Predicated region
    $region30: #{tpu_custom_call.1} parent=1 // pred_check
      _
    $region31: #{tpu_custom_call.1} parent=1 // pred_check_branch
      %30 = sbr.rel (0) target = $region33
    $region32: #{tpu_custom_call.1} parent=1 // pred_region
      _
    $region33: #{tpu_custom_call.1} parent=1 // pred_fallthru
      _
    // Predicated region
    $region34: #{tpu_custom_call.1} parent=1 // pred_check
      _
    $region35: #{tpu_custom_call.1} parent=1 // pred_check_branch
      %32 = sbr.rel (0) target = $region37
    $region36: #{tpu_custom_call.1} parent=1 // pred_region
      _
    $region37: #{tpu_custom_call.1} parent=1 // pred_fallthru
      _
    %v33 = vld [vmem:[%s0] sm:$0xf]
    %v34 = vld [vmem:[%s1] sm:$0xff]
    %v35 = vld [vmem:[%s1 + $0x8] sm:$0xff]
    %v36 = vld [vmem:[%s1 + $0x10] sm:$0xff]
    %v37 = vld [vmem:[%s1 + $0x18] sm:$0x3f]
    %v38 = vld [vmem:[%s2] sm:$0xff]
    %v39 = vld [vmem:[%s2 + $0x8] sm:$0xff]
    %v40 = vld [vmem:[%s2 + $0x10] sm:$0xff]
    %v41 = vld [vmem:[%s2 + $0x18] sm:$0x3f]
    %43 = vset.pattern.permute.xlu0 0
    %44 = vperm.xlu0 %43, %v38
    %v45 = vpop.permute.xlu0 %44
    %48 = vset.pattern.permute.xlu0 0
    %49 = vperm.xlu0 %48, %v39
    %v50 = vpop.permute.xlu0 %49
    %53 = vset.pattern.permute.xlu0 0
    %54 = vperm.xlu0 %53, %v40
    %v55 = vpop.permute.xlu0 %54
    %58 = vset.pattern.permute.xlu0 0
    %59 = vperm.xlu0 %58, %v41
    %v60 = vpop.permute.xlu0 %59
    %vm62 = vcmask 31744
    %v64 = vsel %vm62, %v34, 0
    %v67 = vsel %vm62, %v35, 0
    %v70 = vsel %vm62, %v36, 0
    %v73 = vsel %vm62, %v37, 0
    %vm75 = vcmask 1043456
    %v77 = vsel %vm75, %v33, 0
    %79 = vmatprep.subr.mxu0 0.0
    %80 = vmatpush1.msra.mxu0 %v77
    %81 = vmatprep.subr.mxu0 0.0
    %82 = vmatpush1.msra.mxu0 0.0
    %83 = vmatprep.subr.mxu0 0.0
    %84 = vmatpush1.msra.mxu0 0.0
    %85 = vmatprep.subr.mxu0 0.0
    %86 = vmatpush1.msra.mxu0 0.0
    %87 = vmatprep.subr.mxu0 0.0
    %88 = vmatpush1.msra.mxu0 0.0
    %89 = vmatprep.subr.mxu0 0.0
    %90 = vmatpush1.msra.mxu0 0.0
    %91 = vmatprep.subr.mxu0 0.0
    %92 = vmatpush1.msra.mxu0 0.0
    %93 = vmatprep.subr.mxu0 0.0
    %94 = vmatpush1.msra.mxu0 0.0
    %95 = vmatprep.subr.mxu0 0.0
    %96 = vmatpush1.msra.mxu0 0.0
    %97 = vmatprep.subr.mxu0 0.0
    %98 = vmatpush1.msra.mxu0 0.0
    %99 = vmatprep.subr.mxu0 0.0
    %100 = vmatpush1.msra.mxu0 0.0
    %101 = vmatprep.subr.mxu0 0.0
    %102 = vmatpush1.msra.mxu0 0.0
    %103 = vmatprep.subr.mxu0 0.0
    %104 = vmatpush1.msra.mxu0 0.0
    %105 = vmatprep.subr.mxu0 0.0
    %106 = vmatpush1.msra.mxu0 0.0
    %107 = vmatprep.subr.mxu0 0.0
    %108 = vmatpush1.msra.mxu0 0.0
    %109 = vmatprep.subr.mxu0 0.0
    %110 = vmatpush1.msra.mxu0 0.0
    %111 = vmatprep.subr.mxu0 0.0
    %112 = vmatpush1.msra.mxu0 0.0
    %113 = vmatprep.subr.mxu0 0.0
    %114 = vmatpush1.msra.mxu0 0.0
    %115 = vmatprep.subr.mxu0 0.0
    %116 = vmatpush1.msra.mxu0 0.0
    %117 = vmatprep.subr.mxu0 0.0
    %118 = vmatpush1.msra.mxu0 0.0
    %119 = vmatprep.subr.mxu0 0.0
    %120 = vmatpush1.msra.mxu0 0.0
    %121 = vmatprep.subr.mxu0 0.0
    %122 = vmatpush1.msra.mxu0 0.0
    %123 = vmatprep.subr.mxu0 0.0
    %124 = vmatpush1.msra.mxu0 0.0
    %125 = vmatprep.subr.mxu0 0.0
    %126 = vmatpush1.msra.mxu0 0.0
    %127 = vmatprep.subr.mxu0 0.0
    %128 = vmatpush1.msra.mxu0 0.0
    %129 = vmatprep.subr.mxu0 0.0
    %130 = vmatpush1.msra.mxu0 0.0
    %131 = vmatprep.subr.mxu0 0.0
    %132 = vmatpush1.msra.mxu0 0.0
    %133 = vmatprep.subr.mxu0 0.0
    %134 = vmatpush1.msra.mxu0 0.0
    %135 = vmatprep.subr.mxu0 0.0
    %136 = vmatpush1.msra.mxu0 0.0
    %137 = vmatprep.subr.mxu0 0.0
    %138 = vmatpush1.msra.mxu0 0.0
    %139 = vmatprep.subr.mxu0 0.0
    %140 = vmatpush1.msra.mxu0 0.0
    %141 = vmatprep.subr.mxu0 0.0
    %142 = vmatpush1.msra.mxu0 0.0
    %143 = vmatprep.mubr.f32.mxu0 0.0
    %144 = vmatmul.mubr.f32.gmra.mrb[0].mxu0 %v64
    %v145 = vpop.f32.mrb[0].mxu0
    %v146 = vadd.f32 %v45, %v145
    %v147 = vpop.f32.mrb[0].mxu0
    %148 = vmatprep.mubr.f32.mxu0 0.0
    %149 = vmatmul.mubr.f32.gmra.mrb[0].mxu0 %v67
    %v150 = vpop.f32.mrb[0].mxu0
    %v151 = vadd.f32 %v50, %v150
    %v152 = vpop.f32.mrb[0].mxu0
    %153 = vmatprep.mubr.f32.mxu0 0.0
    %154 = vmatmul.mubr.f32.gmra.mrb[0].mxu0 %v70
    %v155 = vpop.f32.mrb[0].mxu0
    %v156 = vadd.f32 %v55, %v155
    %v157 = vpop.f32.mrb[0].mxu0
    %158 = vmatprep.mubr.f32.mxu0 0.0
    %159 = vmatmul.mubr.f32.gmra.mrb[0].mxu0 %v73
    %v160 = vpop.f32.mrb[0].mxu0
    %v161 = vadd.f32 %v60, %v160
    %v162 = vpop.f32.mrb[0].mxu0
    %163 = vdwg.mxu0
    %v164 = vxor.u32 %v146, 2147483648
    %v165 = vxor.u32 %v151, 2147483648
    %v166 = vxor.u32 %v156, 2147483648
    %v167 = vxor.u32 %v161, 2147483648
    %v168 = vmul.f32 %v164, 1.442695
    %v169 = vpow.pop %v168
    %v170 = vmul.f32 %v165, 1.442695
    %v171 = vpow.pop %v170
    %v172 = vmul.f32 %v166, 1.442695
    %v173 = vpow.pop %v172
    %v174 = vmul.f32 %v167, 1.442695
    %v175 = vpow.pop %v174
    %v176 = vadd.f32 %v169, 1.0
    %v177 = vadd.f32 %v171, 1.0
    %v178 = vadd.f32 %v173, 1.0
    %v179 = vadd.f32 %v175, 1.0
    %v180 = vrcp.pop %v176
    %v181 = vmul.f32 1.0, %v180
    %v182 = vrcp.pop %v177
    %v183 = vmul.f32 1.0, %v182
    %v184 = vrcp.pop %v178
    %v185 = vmul.f32 1.0, %v184
    %v186 = vrcp.pop %v179
    %v187 = vmul.f32 1.0, %v186
    %v188 = vld [vmem:[%s3] sm:$0xff]
    %v189 = vld [vmem:[%s3 + $0x8] sm:$0xff]
    %v190 = vld [vmem:[%s3 + $0x10] sm:$0xff]
    %v191 = vld [vmem:[%s3 + $0x18] sm:$0x3f]
    %v192 = vld [vmem:[%s4] sm:$0xff]
    %v193 = vld [vmem:[%s4 + $0x8] sm:$0xff]
    %v194 = vld [vmem:[%s4 + $0x10] sm:$0xff]
    %v195 = vld [vmem:[%s4 + $0x18] sm:$0x3f]
    %197 = vset.pattern.permute.xlu0 0
    %198 = vperm.xlu0 %197, %v192
    %v199 = vpop.permute.xlu0 %198
    %202 = vset.pattern.permute.xlu0 0
    %203 = vperm.xlu0 %202, %v193
    %v204 = vpop.permute.xlu0 %203
    %207 = vset.pattern.permute.xlu0 0
    %208 = vperm.xlu0 %207, %v194
    %v209 = vpop.permute.xlu0 %208
    %212 = vset.pattern.permute.xlu0 0
    %213 = vperm.xlu0 %212, %v195
    %v214 = vpop.permute.xlu0 %213
    %vm216 = vcmask 244736
    %v218 = vsel %vm216, %v188, 0
    %v221 = vsel %vm216, %v189, 0
    %v224 = vsel %vm216, %v190, 0
    %v227 = vsel %vm216, %v191, 0
    %vm229 = vcmask 1045504
    %v231 = vsel %vm229, %v187, 0
    %233 = vmatprep.subr.mxu0 0.0
    %234 = vmatpush1.msra.mxu0 %v181
    %235 = vmatprep.subr.mxu0 0.0
    %236 = vmatpush1.msra.mxu0 %v183
    %237 = vmatprep.subr.mxu0 0.0
    %238 = vmatpush1.msra.mxu0 %v185
    %239 = vmatprep.subr.mxu0 0.0
    %240 = vmatpush1.msra.mxu0 %v231
    %241 = vmatprep.subr.mxu0 0.0
    %242 = vmatpush1.msra.mxu0 0.0
    %243 = vmatprep.subr.mxu0 0.0
    %244 = vmatpush1.msra.mxu0 0.0
    %245 = vmatprep.subr.mxu0 0.0
    %246 = vmatpush1.msra.mxu0 0.0
    %247 = vmatprep.subr.mxu0 0.0
    %248 = vmatpush1.msra.mxu0 0.0
    %249 = vmatprep.subr.mxu0 0.0
    %250 = vmatpush1.msra.mxu0 0.0
    %251 = vmatprep.subr.mxu0 0.0
    %252 = vmatpush1.msra.mxu0 0.0
    %253 = vmatprep.subr.mxu0 0.0
    %254 = vmatpush1.msra.mxu0 0.0
    %255 = vmatprep.subr.mxu0 0.0
    %256 = vmatpush1.msra.mxu0 0.0
    %257 = vmatprep.subr.mxu0 0.0
    %258 = vmatpush1.msra.mxu0 0.0
    %259 = vmatprep.subr.mxu0 0.0
    %260 = vmatpush1.msra.mxu0 0.0
    %261 = vmatprep.subr.mxu0 0.0
    %262 = vmatpush1.msra.mxu0 0.0
    %263 = vmatprep.subr.mxu0 0.0
    %264 = vmatpush1.msra.mxu0 0.0
    %265 = vmatprep.subr.mxu0 0.0
    %266 = vmatpush1.msra.mxu0 0.0
    %267 = vmatprep.subr.mxu0 0.0
    %268 = vmatpush1.msra.mxu0 0.0
    %269 = vmatprep.subr.mxu0 0.0
    %270 = vmatpush1.msra.mxu0 0.0
    %271 = vmatprep.subr.mxu0 0.0
    %272 = vmatpush1.msra.mxu0 0.0
    %273 = vmatprep.subr.mxu0 0.0
    %274 = vmatpush1.msra.mxu0 0.0
    %275 = vmatprep.subr.mxu0 0.0
    %276 = vmatpush1.msra.mxu0 0.0
    %277 = vmatprep.subr.mxu0 0.0
    %278 = vmatpush1.msra.mxu0 0.0
    %279 = vmatprep.subr.mxu0 0.0
    %280 = vmatpush1.msra.mxu0 0.0
    %281 = vmatprep.subr.mxu0 0.0
    %282 = vmatpush1.msra.mxu0 0.0
    %283 = vmatprep.subr.mxu0 0.0
    %284 = vmatpush1.msra.mxu0 0.0
    %285 = vmatprep.subr.mxu0 0.0
    %286 = vmatpush1.msra.mxu0 0.0
    %287 = vmatprep.subr.mxu0 0.0
    %288 = vmatpush1.msra.mxu0 0.0
    %289 = vmatprep.subr.mxu0 0.0
    %290 = vmatpush1.msra.mxu0 0.0
    %291 = vmatprep.subr.mxu0 0.0
    %292 = vmatpush1.msra.mxu0 0.0
    %293 = vmatprep.subr.mxu0 0.0
    %294 = vmatpush1.msra.mxu0 0.0
    %295 = vmatprep.subr.mxu0 0.0
    %296 = vmatpush1.msra.mxu0 0.0
    %297 = vmatprep.mubr.f32.mxu0 0.0
    %298 = vmatmul.mubr.f32.gmra.mrb[0].mxu0 %v218
    %v299 = vpop.f32.mrb[0].mxu0
    %v300 = vadd.f32 %v199, %v299
    %v301 = vpop.f32.mrb[0].mxu0
    %302 = vmatprep.mubr.f32.mxu0 0.0
    %303 = vmatmul.mubr.f32.gmra.mrb[0].mxu0 %v221
    %v304 = vpop.f32.mrb[0].mxu0
    %v305 = vadd.f32 %v204, %v304
    %v306 = vpop.f32.mrb[0].mxu0
    %307 = vmatprep.mubr.f32.mxu0 0.0
    %308 = vmatmul.mubr.f32.gmra.mrb[0].mxu0 %v224
    %v309 = vpop.f32.mrb[0].mxu0
    %v310 = vadd.f32 %v209, %v309
    %v311 = vpop.f32.mrb[0].mxu0
    %312 = vmatprep.mubr.f32.mxu0 0.0
    %313 = vmatmul.mubr.f32.gmra.mrb[0].mxu0 %v227
    %v314 = vpop.f32.mrb[0].mxu0
    %v315 = vadd.f32 %v214, %v314
    %v316 = vpop.f32.mrb[0].mxu0
    %317 = vdwg.mxu0
    %v318 = vxor.u32 %v300, 2147483648
    %v319 = vxor.u32 %v305, 2147483648
    %v320 = vxor.u32 %v310, 2147483648
    %v321 = vxor.u32 %v315, 2147483648
    %v322 = vmul.f32 %v318, 1.442695
    %v323 = vpow.pop %v322
    %v324 = vmul.f32 %v319, 1.442695
    %v325 = vpow.pop %v324
    %v326 = vmul.f32 %v320, 1.442695
    %v327 = vpow.pop %v326
    %v328 = vmul.f32 %v321, 1.442695
    %v329 = vpow.pop %v328
    %v330 = vadd.f32 %v323, 1.0
    %v331 = vadd.f32 %v325, 1.0
    %v332 = vadd.f32 %v327, 1.0
    %v333 = vadd.f32 %v329, 1.0
    %v334 = vrcp.pop %v330
    %v335 = vmul.f32 1.0, %v334
    %v336 = vrcp.pop %v331
    %v337 = vmul.f32 1.0, %v336
    %v338 = vrcp.pop %v332
    %v339 = vmul.f32 1.0, %v338
    %v340 = vrcp.pop %v333
    %v341 = vmul.f32 1.0, %v340
    %v342 = vld [vmem:[%s5] sm:$0xff]
    %v343 = vld [vmem:[%s5 + $0x8] sm:$0xff]
    %v344 = vld [vmem:[%s5 + $0x10] sm:$0xff]
    %v345 = vld [vmem:[%s5 + $0x18] sm:$0x3f]
    %v346 = vld [vmem:[%s6] sm:$0xff]
    %v347 = vld [vmem:[%s6 + $0x8] sm:$0xff]
    %v348 = vld [vmem:[%s6 + $0x10] sm:$0xff]
    %v349 = vld [vmem:[%s6 + $0x18] sm:$0x3f]
    %351 = vset.pattern.permute.xlu0 0
    %352 = vperm.xlu0 %351, %v346
    %v353 = vpop.permute.xlu0 %352
    %356 = vset.pattern.permute.xlu0 0
    %357 = vperm.xlu0 %356, %v347
    %v358 = vpop.permute.xlu0 %357
    %361 = vset.pattern.permute.xlu0 0
    %362 = vperm.xlu0 %361, %v348
    %v363 = vpop.permute.xlu0 %362
    %366 = vset.pattern.permute.xlu0 0
    %367 = vperm.xlu0 %366, %v349
    %v368 = vpop.permute.xlu0 %367
    %v371 = vsel %vm216, %v342, 0
    %v374 = vsel %vm216, %v343, 0
    %v377 = vsel %vm216, %v344, 0
    %v380 = vsel %vm216, %v345, 0
    %v383 = vsel %vm229, %v341, 0
    %385 = vmatprep.subr.mxu0 0.0
    %386 = vmatpush1.msra.mxu0 %v335
    %387 = vmatprep.subr.mxu0 0.0
    %388 = vmatpush1.msra.mxu0 %v337
    %389 = vmatprep.subr.mxu0 0.0
    %390 = vmatpush1.msra.mxu0 %v339
    %391 = vmatprep.subr.mxu0 0.0
    %392 = vmatpush1.msra.mxu0 %v383
    %393 = vmatprep.subr.mxu0 0.0
    %394 = vmatpush1.msra.mxu0 0.0
    %395 = vmatprep.subr.mxu0 0.0
    %396 = vmatpush1.msra.mxu0 0.0
    %397 = vmatprep.subr.mxu0 0.0
    %398 = vmatpush1.msra.mxu0 0.0
    %399 = vmatprep.subr.mxu0 0.0
    %400 = vmatpush1.msra.mxu0 0.0
    %401 = vmatprep.subr.mxu0 0.0
    %402 = vmatpush1.msra.mxu0 0.0
    %403 = vmatprep.subr.mxu0 0.0
    %404 = vmatpush1.msra.mxu0 0.0
    %405 = vmatprep.subr.mxu0 0.0
    %406 = vmatpush1.msra.mxu0 0.0
    %407 = vmatprep.subr.mxu0 0.0
    %408 = vmatpush1.msra.mxu0 0.0
    %409 = vmatprep.subr.mxu0 0.0
    %410 = vmatpush1.msra.mxu0 0.0
    %411 = vmatprep.subr.mxu0 0.0
    %412 = vmatpush1.msra.mxu0 0.0
    %413 = vmatprep.subr.mxu0 0.0
    %414 = vmatpush1.msra.mxu0 0.0
    %415 = vmatprep.subr.mxu0 0.0
    %416 = vmatpush1.msra.mxu0 0.0
    %417 = vmatprep.subr.mxu0 0.0
    %418 = vmatpush1.msra.mxu0 0.0
    %419 = vmatprep.subr.mxu0 0.0
    %420 = vmatpush1.msra.mxu0 0.0
    %421 = vmatprep.subr.mxu0 0.0
    %422 = vmatpush1.msra.mxu0 0.0
    %423 = vmatprep.subr.mxu0 0.0
    %424 = vmatpush1.msra.mxu0 0.0
    %425 = vmatprep.subr.mxu0 0.0
    %426 = vmatpush1.msra.mxu0 0.0
    %427 = vmatprep.subr.mxu0 0.0
    %428 = vmatpush1.msra.mxu0 0.0
    %429 = vmatprep.subr.mxu0 0.0
    %430 = vmatpush1.msra.mxu0 0.0
    %431 = vmatprep.subr.mxu0 0.0
    %432 = vmatpush1.msra.mxu0 0.0
    %433 = vmatprep.subr.mxu0 0.0
    %434 = vmatpush1.msra.mxu0 0.0
    %435 = vmatprep.subr.mxu0 0.0
    %436 = vmatpush1.msra.mxu0 0.0
    %437 = vmatprep.subr.mxu0 0.0
    %438 = vmatpush1.msra.mxu0 0.0
    %439 = vmatprep.subr.mxu0 0.0
    %440 = vmatpush1.msra.mxu0 0.0
    %441 = vmatprep.subr.mxu0 0.0
    %442 = vmatpush1.msra.mxu0 0.0
    %443 = vmatprep.subr.mxu0 0.0
    %444 = vmatpush1.msra.mxu0 0.0
    %445 = vmatprep.subr.mxu0 0.0
    %446 = vmatpush1.msra.mxu0 0.0
    %447 = vmatprep.subr.mxu0 0.0
    %448 = vmatpush1.msra.mxu0 0.0
    %449 = vmatprep.mubr.f32.mxu0 0.0
    %450 = vmatmul.mubr.f32.gmra.mrb[0].mxu0 %v371
    %v451 = vpop.f32.mrb[0].mxu0
    %v452 = vadd.f32 %v353, %v451
    %v453 = vpop.f32.mrb[0].mxu0
    %454 = vmatprep.mubr.f32.mxu0 0.0
    %455 = vmatmul.mubr.f32.gmra.mrb[0].mxu0 %v374
    %v456 = vpop.f32.mrb[0].mxu0
    %v457 = vadd.f32 %v358, %v456
    %v458 = vpop.f32.mrb[0].mxu0
    %459 = vmatprep.mubr.f32.mxu0 0.0
    %460 = vmatmul.mubr.f32.gmra.mrb[0].mxu0 %v377
    %v461 = vpop.f32.mrb[0].mxu0
    %v462 = vadd.f32 %v363, %v461
    %v463 = vpop.f32.mrb[0].mxu0
    %464 = vmatprep.mubr.f32.mxu0 0.0
    %465 = vmatmul.mubr.f32.gmra.mrb[0].mxu0 %v380
    %v466 = vpop.f32.mrb[0].mxu0
    %v467 = vadd.f32 %v368, %v466
    %v468 = vpop.f32.mrb[0].mxu0
    %469 = vdwg.mxu0
    %v470 = vxor.u32 %v452, 2147483648
    %v471 = vxor.u32 %v457, 2147483648
    %v472 = vxor.u32 %v462, 2147483648
    %v473 = vxor.u32 %v467, 2147483648
    %v474 = vmul.f32 %v470, 1.442695
    %v475 = vpow.pop %v474
    %v476 = vmul.f32 %v471, 1.442695
    %v477 = vpow.pop %v476
    %v478 = vmul.f32 %v472, 1.442695
    %v479 = vpow.pop %v478
    %v480 = vmul.f32 %v473, 1.442695
    %v481 = vpow.pop %v480
    %v482 = vadd.f32 %v475, 1.0
    %v483 = vadd.f32 %v477, 1.0
    %v484 = vadd.f32 %v479, 1.0
    %v485 = vadd.f32 %v481, 1.0
    %v486 = vrcp.pop %v482
    %v487 = vmul.f32 1.0, %v486
    %v488 = vrcp.pop %v483
    %v489 = vmul.f32 1.0, %v488
    %v490 = vrcp.pop %v484
    %v491 = vmul.f32 1.0, %v490
    %v492 = vrcp.pop %v485
    %v493 = vmul.f32 1.0, %v492
    %v494 = vld [vmem:[%s7] sm:$0x7]
    %v495 = vld [vmem:[%s8] sm:$0x7]
    %497 = vset.pattern.permute.xlu0 0
    %498 = vperm.xlu0 %497, %v495
    %v499 = vpop.permute.xlu0 %498
    %v502 = vsel %vm216, %v494, 0
    %v505 = vsel %vm229, %v493, 0
    %507 = vmatprep.subr.mxu0 0.0
    %508 = vmatpush1.msra.mxu0 %v487
    %509 = vmatprep.subr.mxu0 0.0
    %510 = vmatpush1.msra.mxu0 %v489
    %511 = vmatprep.subr.mxu0 0.0
    %512 = vmatpush1.msra.mxu0 %v491
    %513 = vmatprep.subr.mxu0 0.0
    %514 = vmatpush1.msra.mxu0 %v505
    %515 = vmatprep.subr.mxu0 0.0
    %516 = vmatpush1.msra.mxu0 0.0
    %517 = vmatprep.subr.mxu0 0.0
    %518 = vmatpush1.msra.mxu0 0.0
    %519 = vmatprep.subr.mxu0 0.0
    %520 = vmatpush1.msra.mxu0 0.0
    %521 = vmatprep.subr.mxu0 0.0
    %522 = vmatpush1.msra.mxu0 0.0
    %523 = vmatprep.subr.mxu0 0.0
    %524 = vmatpush1.msra.mxu0 0.0
    %525 = vmatprep.subr.mxu0 0.0
    %526 = vmatpush1.msra.mxu0 0.0
    %527 = vmatprep.subr.mxu0 0.0
    %528 = vmatpush1.msra.mxu0 0.0
    %529 = vmatprep.subr.mxu0 0.0
    %530 = vmatpush1.msra.mxu0 0.0
    %531 = vmatprep.subr.mxu0 0.0
    %532 = vmatpush1.msra.mxu0 0.0
    %533 = vmatprep.subr.mxu0 0.0
    %534 = vmatpush1.msra.mxu0 0.0
    %535 = vmatprep.subr.mxu0 0.0
    %536 = vmatpush1.msra.mxu0 0.0
    %537 = vmatprep.subr.mxu0 0.0
    %538 = vmatpush1.msra.mxu0 0.0
    %539 = vmatprep.subr.mxu0 0.0
    %540 = vmatpush1.msra.mxu0 0.0
    %541 = vmatprep.subr.mxu0 0.0
    %542 = vmatpush1.msra.mxu0 0.0
    %543 = vmatprep.subr.mxu0 0.0
    %544 = vmatpush1.msra.mxu0 0.0
    %545 = vmatprep.subr.mxu0 0.0
    %546 = vmatpush1.msra.mxu0 0.0
    %547 = vmatprep.subr.mxu0 0.0
    %548 = vmatpush1.msra.mxu0 0.0
    %549 = vmatprep.subr.mxu0 0.0
    %550 = vmatpush1.msra.mxu0 0.0
    %551 = vmatprep.subr.mxu0 0.0
    %552 = vmatpush1.msra.mxu0 0.0
    %553 = vmatprep.subr.mxu0 0.0
    %554 = vmatpush1.msra.mxu0 0.0
    %555 = vmatprep.subr.mxu0 0.0
    %556 = vmatpush1.msra.mxu0 0.0
    %557 = vmatprep.subr.mxu0 0.0
    %558 = vmatpush1.msra.mxu0 0.0
    %559 = vmatprep.subr.mxu0 0.0
    %560 = vmatpush1.msra.mxu0 0.0
    %561 = vmatprep.subr.mxu0 0.0
    %562 = vmatpush1.msra.mxu0 0.0
    %563 = vmatprep.subr.mxu0 0.0
    %564 = vmatpush1.msra.mxu0 0.0
    %565 = vmatprep.subr.mxu0 0.0
    %566 = vmatpush1.msra.mxu0 0.0
    %567 = vmatprep.subr.mxu0 0.0
    %568 = vmatpush1.msra.mxu0 0.0
    %569 = vmatprep.subr.mxu0 0.0
    %570 = vmatpush1.msra.mxu0 0.0
    %571 = vmatprep.mubr.f32.mxu0 0.0
    %572 = vmatmul.mubr.f32.gmra.mrb[0].mxu0 %v502
    %v573 = vpop.f32.mrb[0].mxu0
    %v574 = vadd.f32 %v499, %v573
    %v575 = vpop.f32.mrb[0].mxu0
    %576 = vdwg.mxu0
    %vm577 = vcmask 59392
    %v578 = vsel %vm577, %v574, -inf
    %v579 = vrot.slane %v578, 4
    %v580 = vmax.f32 %v578, %v579
    %v581 = vrot.slane %v580, 2
    %v582 = vmax.f32 %v580, %v581
    %v583 = vrot.slane %v582, 1
    %v584 = vmax.f32 %v582, %v583
    %v585 = vsub.f32 %v574, %v584
    %v586 = vmul.f32 %v585, 1.442695
    %v587 = vpow.pop %v586
    %v588 = vsel %vm577, %v587, 0.0
    %v589 = vrot.slane %v588, 4
    %v590 = vadd.f32 %v588, %v589
    %v591 = vrot.slane %v590, 2
    %v592 = vadd.f32 %v590, %v591
    %v593 = vrot.slane %v592, 1
    %v594 = vadd.f32 %v592, %v593
    %v595 = vlog2.pop %v594
    %v596 = vmul.f32 %v595, 0.6931472
    %v597 = vsub.f32 %v585, %v596
    %598 = vst.msk [vmem:[#allocation2] sm:$0x7] %vm577, %v597
    // Predicated region
    $region38: #{tpu_custom_call.1} parent=1 // pred_check
      _
    $region39: #{tpu_custom_call.1} parent=1 // pred_check_branch
      %600 = sbr.rel (0) target = $region41
    $region40: #{tpu_custom_call.1} parent=1 // pred_region
      %s602 = ssub.s32 64, 64
      %603 = vsyncadd [#allocation3], %s602
      %s605 = sshll.u32 [#allocation2], 4
      %s606 = int_to_ptr.vmem [resolvable:$true] %s605
      %608 = dma.vmem_to_hbm [thread:$0]  %s606, 64, %s9, [#allocation3]
    $region41: #{tpu_custom_call.1} parent=1 // pred_fallthru
      _
    // Predicated region
    $region42: #{tpu_custom_call.1} parent=1 // pred_check
      _
    $region43: #{tpu_custom_call.1} parent=1 // pred_check_branch
      %610 = sbr.rel (0) target = $region45
    $region44: #{tpu_custom_call.1} parent=1 // pred_region
      %611 = dma.done [#allocation3], 64
    $region45: #{tpu_custom_call.1} parent=1 // pred_fallthru
      _
    %612 = vsyncpa [#allocation3], 1

</llo_original>
